<compile_context>
chip_gen: v7x
topology: tpu7x:2x2x1
jax: 0.10.0
libtpu: 0.0.40
codegen_flags: <defaults>
</compile_context>

<pallas_src>
import functools

import jax
import jax.numpy as jnp
from jax import lax
from jax.experimental import pallas as pl
from jax.experimental.pallas import tpu as pltpu


def _patch_embed_kernel(a_ref, w_ref, b_ref, o_ref):
    # a_ref: (TM, K) bf16 patches;  w_ref: (E, K) bf16 flattened conv weight
    # b_ref: (1, E)  f32 bias;      o_ref: (TM, E) output (f32 or bf16)
    acc = lax.dot_general(
        a_ref[...], w_ref[...],
        dimension_numbers=(((1,), (1,)), ((), ())),   # contract K of both
        preferred_element_type=jnp.float32,
    )
    o_ref[...] = (acc + b_ref[...]).astype(o_ref.dtype)


def _vmem_capacity_bytes():
    try:
        info = pltpu.get_tpu_info()
        return int(getattr(info, "vmem_capacity_bytes", 64 * 1024 * 1024))
    except Exception:  # pragma: no cover - conservative fallback
        return 64 * 1024 * 1024


def _pick_tm(M, K, E, out_itemsize, vmem_cap):
    """Largest MXU-aligned M tile whose double-buffered footprint fits VMEM."""
    resident = E * K * 2 + E * 4                      # weight + bias, single copy
    budget = int(vmem_cap * 0.6)                      # headroom for compiler scratch

    def tile_bytes(tm):                               # double-buffered per-step bytes
        return 2 * (tm * K * 2 + tm * E * out_itemsize)

    tm = 128
    for cand in (2048, 1024, 512, 256, 128):
        if resident + tile_bytes(cand) <= budget:
            tm = cand
            break
    # Prefer >= 2 grid steps when M is large enough so megacore (v7x) can split M.
    while tm > 256 and M > 256 and pl.cdiv(M, tm) < 2:
        tm //= 2
    if tm >= M:
        tm = M                                        # single full-extent tile (no masking)
    need = resident + tile_bytes(tm)
    vmem_limit = int(min(vmem_cap * 3 // 4, max(16 * 1024 * 1024, 2 * need)))
    return tm, vmem_limit


@functools.partial(jax.jit, static_argnames=("patch_size", "out_dtype"))
def _patch_embed_tokens(x, weight, bias, patch_size, out_dtype):
    B, C, H, W = x.shape
    P = patch_size
    Gh, Gw = H // P, W // P
    N = Gh * Gw
    E = weight.shape[0]
    K = C * P * P
    M = B * N                                         # fold batch into matmul M

    # ---- glue: extract non-overlapping patches -> (M, K) in bf16 (K order C,P,P) ----
    xb = x.astype(jnp.bfloat16)
    patches = xb.reshape(B, C, Gh, P, Gw, P)
    patches = patches.transpose(0, 2, 4, 1, 3, 5).reshape(M, K)

    # ---- weight stays (E, K): pure reshape, no wrapper transpose pass ----
    w_flat = weight.reshape(E, K).astype(jnp.bfloat16)
    b_flat = bias.reshape(1, E).astype(jnp.float32)

    out_itemsize = jnp.dtype(out_dtype).itemsize
    tm, vmem_limit = _pick_tm(M, K, E, out_itemsize, _vmem_capacity_bytes())
    grid = (pl.cdiv(M, tm),)                          # 1-D grid over M only

    cost = pl.CostEstimate(
        flops=2 * M * K * E,
        transcendentals=0,
        bytes_accessed=M * K * 2 + K * E * 2 + E * 4 + M * E * out_itemsize,
    )

    out = pl.pallas_call(
        _patch_embed_kernel,
        out_shape=jax.ShapeDtypeStruct((M, E), out_dtype),
        grid_spec=pltpu.PrefetchScalarGridSpec(
            num_scalar_prefetch=0,
            grid=grid,
            in_specs=[
                pl.BlockSpec((tm, K), lambda i: (i, 0)),   # patches M-tile, full K
                pl.BlockSpec((E, K), lambda i: (0, 0)),    # weight: VMEM-resident
                pl.BlockSpec((1, E), lambda i: (0, 0)),    # bias:   VMEM-resident
            ],
            out_specs=pl.BlockSpec((tm, E), lambda i: (i, 0)),
        ),
        compiler_params=pltpu.CompilerParams(
            dimension_semantics=("parallel",),             # megacore shards long M axis
            vmem_limit_bytes=vmem_limit,
        ),
        cost_estimate=cost,
    )(patches, w_flat, b_flat)

    return out.reshape(B, N, E)


def patch_embed_with_size(x, weight, bias, patch_size, out_dtype=None):
    """x: (B, C, H, W); weight: (E, C, P, P); bias: (E,).
    Returns (tokens (B, N, E), feat_size (Gh, Gw)), matching PatchEmbedWithSize
    with flatten=True and norm_layer=None (Identity)."""
    B, C, H, W = x.shape
    P = patch_size
    assert H % P == 0 and W % P == 0, "H/W must be divisible by patch size"
    out_dtype = jnp.dtype(x.dtype if out_dtype is None else out_dtype)
    tokens = _patch_embed_tokens(x, weight, bias, P, out_dtype)
    return tokens, (H // P, W // P)


def _reference(x, weight, bias, patch_size):
    """Plain-JAX reference: strided conv (NCHW) + flatten(2).transpose(1,2)."""
    y = lax.conv_general_dilated(
        x.astype(jnp.float32), weight.astype(jnp.float32),
        window_strides=(patch_size, patch_size), padding="VALID",
        dimension_numbers=("NCHW", "OIHW", "NCHW"))
    y = y + bias.reshape(1, -1, 1, 1)
    B, E, Gh, Gw = y.shape
    return y.reshape(B, E, Gh * Gw).transpose(0, 2, 1), (Gh, Gw)


if __name__ == "__main__":
    # Small shapes consistent with the module: img_size=16, patch_size=2,
    # in_channels=4, embed_dim=32, batch=2.
    B, C, H, W = 2, 4, 16, 16
    P = 2
    E = 32

    key = jax.random.PRNGKey(0)
    kx, kw, kb = jax.random.split(key, 3)
    x = jax.random.normal(kx, (B, C, H, W), dtype=jnp.float32)
    fan_in = C * P * P
    weight = jax.random.normal(kw, (E, C, P, P), dtype=jnp.float32) / jnp.sqrt(fan_in)
    bias = jax.random.normal(kb, (E,), dtype=jnp.float32) * 0.01

    out, feat_size = patch_embed_with_size(x, weight, bias, P)
    out = jax.block_until_ready(out)

    ref, ref_feat = _reference(x, weight, bias, P)
    assert out.shape == (B, (H // P) * (W // P), E)
    assert tuple(feat_size) == tuple(ref_feat)
    # bf16 MXU inputs with f32 accumulation vs. f32 conv reference -> looser tol.
    assert jnp.allclose(out, ref, atol=5e-2, rtol=5e-2)

    print("KERNEL_OK")
</pallas_src>

<mosaic_0001>
module attributes {stable_mosaic.version = 11 : i64} {
  func.func @_patch_embed_kernel(%arg0: i32, %arg1: memref<128x16xbf16, #tpu.memory_space<vmem>>, %arg2: memref<32x16xbf16, #tpu.memory_space<vmem>>, %arg3: memref<1x32xf32, #tpu.memory_space<vmem>>, %arg4: memref<128x32xf32, #tpu.memory_space<vmem>>) attributes {dimension_semantics = [#tpu.dimension_semantics<parallel>], iteration_bounds = array<i64: 1>, scalar_prefetch = 0 : i64, scratch_operands = 0 : i64, tpu.core_type = #tpu.core_type<tc>, window_params = [{transform_indices = @transform_0, window_bounds = array<i64: 128, 16>}, {pipeline_mode = #tpu.pipeline_mode<synchronous>, transform_indices = @transform_1, window_bounds = array<i64: 32, 16>}, {pipeline_mode = #tpu.pipeline_mode<synchronous>, transform_indices = @transform_2, window_bounds = array<i64: 1, 32>}, {transform_indices = @transform_3, window_bounds = array<i64: 128, 32>}]} {
    %c0 = arith.constant 0 : index
    %c0_0 = arith.constant 0 : index
    %0 = vector.load %arg1[%c0, %c0_0] : memref<128x16xbf16, #tpu.memory_space<vmem>>, vector<128x16xbf16>
    %c0_1 = arith.constant 0 : index
    %c0_2 = arith.constant 0 : index
    %1 = vector.load %arg2[%c0_1, %c0_2] : memref<32x16xbf16, #tpu.memory_space<vmem>>, vector<32x16xbf16>
    %cst = arith.constant dense<0.000000e+00> : vector<128x32xf32>
    %2 = tpu.matmul %0, %1, %cst {dimension_numbers = #tpu.dot_dimension_numbers<[1], [1], [0], [0], [0, 0, 1, 0], [], []>} : vector<128x16xbf16>, vector<32x16xbf16>, vector<128x32xf32> -> vector<128x32xf32>
    %c0_3 = arith.constant 0 : index
    %c0_4 = arith.constant 0 : index
    %3 = vector.load %arg3[%c0_3, %c0_4] : memref<1x32xf32, #tpu.memory_space<vmem>>, vector<1x32xf32>
    %4 = vector.broadcast %3 : vector<1x32xf32> to vector<128x32xf32>
    %5 = arith.addf %2, %4 : vector<128x32xf32>
    %c0_5 = arith.constant 0 : index
    %c0_6 = arith.constant 0 : index
    %6 = vector.load %arg4[%c0_5, %c0_6] : memref<128x32xf32, #tpu.memory_space<vmem>>, vector<128x32xf32>
    tpu.vector_store %arg4[%c0_5, %c0_6], %5 {strides = array<i32>} : memref<128x32xf32, #tpu.memory_space<vmem>>, vector<128x32xf32>,
    return
  }
  func.func @transform_0(%arg0: i32) -> (i32, i32) {
    %c0_i32 = arith.constant 0 : i32
    %c0_i32_0 = arith.constant 0 : i32
    return %arg0, %c0_i32 : i32, i32
  }
  func.func @transform_1(%arg0: i32) -> (i32, i32) {
    %c0_i32 = arith.constant 0 : i32
    %c0_i32_0 = arith.constant 0 : i32
    %c0_i32_1 = arith.constant 0 : i32
    return %c0_i32, %c0_i32_0 : i32, i32
  }
  func.func @transform_2(%arg0: i32) -> (i32, i32) {
    %c0_i32 = arith.constant 0 : i32
    %c0_i32_0 = arith.constant 0 : i32
    %c0_i32_1 = arith.constant 0 : i32
    return %c0_i32, %c0_i32_0 : i32, i32
  }
  func.func @transform_3(%arg0: i32) -> (i32, i32) {
    %c0_i32 = arith.constant 0 : i32
    %c0_i32_0 = arith.constant 0 : i32
    return %arg0, %c0_i32 : i32, i32
  }
}

</mosaic_0001>

<llo_original>
// kernel: _patch_embed_tokens.1
$region0: #{_patch_embed_tokens.1}
  #allocation0 [shape = 'u32[]', space=smem, size = 0x4, offset = 0x4, fixed_abs, tag = 'smem constant byte address 0x4 - core index']
  #allocation1 [shape = 'u32[144,128]{1,0:T(1,128)}', space=vmem, size = 0x12000, scoped, tag = 'internal scratch']
  %s0 = inlined_call_operand.vmem [shape: bf16[128,16], index: 0, kind: input, shape index: {}]
  %s1 = inlined_call_operand.vmem [shape: bf16[32,16], index: 1, kind: input, shape index: {}]
  %s2 = inlined_call_operand.vmem [shape: f32[1,32], index: 2, kind: input, shape index: {}]
  %s3 = inlined_call_operand.vmem [shape: f32[128,32], index: 3, kind: output, shape index: {}]
  %s4 = sld [smem:[#allocation0]]
  $region22: #{_patch_embed_tokens.1} parent=0
    _
  %s6 = ssub.s32 1, %s4
  %s7 = scalar_select 0, %s6, %s4
  // Predicated region
  $region2: #{_patch_embed_tokens.1} parent=0 // pred_check
    _
  $region3: #{_patch_embed_tokens.1} parent=0 // pred_check_branch
    %9 = sbr.rel (0) target = $region5
  $region4: #{_patch_embed_tokens.1} parent=0 // pred_region
    _
  $region5: #{_patch_embed_tokens.1} parent=0 // pred_fallthru
    _
  // Predicated region
  $region6: #{_patch_embed_tokens.1} parent=0 // pred_check
    _
  $region7: #{_patch_embed_tokens.1} parent=0 // pred_check_branch
    %11 = sbr.rel (0) target = $region9
  $region8: #{_patch_embed_tokens.1} parent=0 // pred_region
    _
  $region9: #{_patch_embed_tokens.1} parent=0 // pred_fallthru
    _
  // Predicated region
  $region10: #{_patch_embed_tokens.1} parent=0 // pred_check
    _
  $region11: #{_patch_embed_tokens.1} parent=0 // pred_check_branch
    %13 = sbr.rel (0) target = $region13
  $region12: #{_patch_embed_tokens.1} parent=0 // pred_region
    _
  $region13: #{_patch_embed_tokens.1} parent=0 // pred_fallthru
    _
  %v15 = vld [vmem:[%s0] sm:$0xf]
  %v16 = vld [vmem:[%s0 + $0x4] sm:$0xf]
  %v17 = vld [vmem:[%s0 + $0x8] sm:$0xf]
  %v18 = vld [vmem:[%s0 + $0xc] sm:$0xf]
  %v19 = vld [vmem:[%s0 + $0x10] sm:$0xf]
  %v20 = vld [vmem:[%s0 + $0x14] sm:$0xf]
  %v21 = vld [vmem:[%s0 + $0x18] sm:$0xf]
  %v22 = vld [vmem:[%s0 + $0x1c] sm:$0xf]
  %v23 = vld [vmem:[%s0 + $0x20] sm:$0xf]
  %v24 = vld [vmem:[%s0 + $0x24] sm:$0xf]
  %v25 = vld [vmem:[%s0 + $0x28] sm:$0xf]
  %v26 = vld [vmem:[%s0 + $0x2c] sm:$0xf]
  %v27 = vld [vmem:[%s0 + $0x30] sm:$0xf]
  %v28 = vld [vmem:[%s0 + $0x34] sm:$0xf]
  %v29 = vld [vmem:[%s0 + $0x38] sm:$0xf]
  %v30 = vld [vmem:[%s0 + $0x3c] sm:$0xf]
  %v31 = vld [vmem:[%s1] sm:$0xf]
  %v32 = vld [vmem:[%s1 + $0x4] sm:$0xf]
  %v33 = vld [vmem:[%s1 + $0x8] sm:$0xf]
  %v34 = vld [vmem:[%s1 + $0xc] sm:$0xf]
  %v35 = vld [vmem:[%s2] sm:$0x1]
  %v37 = vlaneseq
  %v38 = vshrl.u32 %v37, 7
  %v39 = vsub.s32 0, %v38
  %v40 = vrot.slane %v35, %v39
  %v58 = vunpack.c.l.b16 %v15
  %v59 = vunpack.c.l.b16 %v16
  %v60 = vunpack.c.l.b16 %v17
  %v61 = vunpack.c.l.b16 %v18
  %v62 = vunpack.c.l.b16 %v19
  %v63 = vunpack.c.l.b16 %v20
  %v64 = vunpack.c.l.b16 %v21
  %v65 = vunpack.c.l.b16 %v22
  %v66 = vunpack.c.l.b16 %v23
  %v67 = vunpack.c.l.b16 %v24
  %v68 = vunpack.c.l.b16 %v25
  %v69 = vunpack.c.l.b16 %v26
  %v70 = vunpack.c.l.b16 %v27
  %v71 = vunpack.c.l.b16 %v28
  %v72 = vunpack.c.l.b16 %v29
  %v73 = vunpack.c.l.b16 %v30
  %v74 = vpack.c.b16 %v59, %v58
  %v75 = vpack.c.b16 %v61, %v60
  %v76 = vpack.c.b16 %v63, %v62
  %v77 = vpack.c.b16 %v65, %v64
  %v78 = vpack.c.b16 %v67, %v66
  %v79 = vpack.c.b16 %v69, %v68
  %v80 = vpack.c.b16 %v71, %v70
  %v81 = vpack.c.b16 %v73, %v72
  %v86 = vunpack.c.l.b16 %v31
  %v87 = vunpack.c.l.b16 %v32
  %v88 = vunpack.c.l.b16 %v33
  %v89 = vunpack.c.l.b16 %v34
  %v90 = vpack.c.b16 %v87, %v86
  %v91 = vpack.c.b16 %v89, %v88
  %vm92 = vcmask 130048
  %v94 = vsel %vm92, %v74, 0
  %v97 = vsel %vm92, %v75, 0
  %v100 = vsel %vm92, %v76, 0
  %v103 = vsel %vm92, %v77, 0
  %v106 = vsel %vm92, %v78, 0
  %v109 = vsel %vm92, %v79, 0
  %v112 = vsel %vm92, %v80, 0
  %v115 = vsel %vm92, %v81, 0
  %v118 = vsel %vm92, %v90, 0
  %v121 = vsel %vm92, %v91, 0
  %123 = vmatprep.subr.bf16.mxu0 0
  %124 = vmatpush1.bf16.xpose.msra.mxu0 %v118
  %125 = vmatprep.subr.bf16.mxu0 0
  %126 = vmatpush1.bf16.xpose.msra.mxu0 %v121
  %127 = vmatprep.subr.bf16.mxu0 0
  %128 = vmatpush1.bf16.xpose.msra.mxu0 0
  %129 = vmatprep.subr.bf16.mxu0 0
  %130 = vmatpush1.bf16.xpose.msra.mxu0 0
  %131 = vmatprep.subr.bf16.mxu0 0
  %132 = vmatpush1.bf16.xpose.msra.mxu0 0
  %133 = vmatprep.subr.bf16.mxu0 0
  %134 = vmatpush1.bf16.xpose.msra.mxu0 0
  %135 = vmatprep.subr.bf16.mxu0 0
  %136 = vmatpush1.bf16.xpose.msra.mxu0 0
  %137 = vmatprep.subr.bf16.mxu0 0
  %138 = vmatpush1.bf16.xpose.msra.mxu0 0
  %139 = vmatprep.subr.bf16.mxu0 0
  %140 = vmatpush1.bf16.xpose.msra.mxu0 0
  %141 = vmatprep.subr.bf16.mxu0 0
  %142 = vmatpush1.bf16.xpose.msra.mxu0 0
  %143 = vmatprep.subr.bf16.mxu0 0
  %144 = vmatpush1.bf16.xpose.msra.mxu0 0
  %145 = vmatprep.subr.bf16.mxu0 0
  %146 = vmatpush1.bf16.xpose.msra.mxu0 0
  %147 = vmatprep.subr.bf16.mxu0 0
  %148 = vmatpush1.bf16.xpose.msra.mxu0 0
  %149 = vmatprep.subr.bf16.mxu0 0
  %150 = vmatpush1.bf16.xpose.msra.mxu0 0
  %151 = vmatprep.subr.bf16.mxu0 0
  %152 = vmatpush1.bf16.xpose.msra.mxu0 0
  %153 = vmatprep.subr.bf16.mxu0 0
  %154 = vmatpush1.bf16.xpose.msra.mxu0 0
  %155 = vmatprep.mubr.bf16.mxu0 0
  %156 = vmatmul.mubr.bf16.gmra.mrb[0].mxu0 %v94
  %v157 = vpop.f32.mrb[0].mxu0
  %v158 = vadd.f32 %v40, %v157
  %v159 = vpop.f32.mrb[0].mxu0
  %v160 = vpop.f32.mrb[0].mxu0
  %v161 = vadd.f32 %v40, %v160
  %v162 = vpop.f32.mrb[0].mxu0
  %163 = vmatprep.mubr.bf16.mxu0 0
  %164 = vmatmul.mubr.bf16.gmra.mrb[0].mxu0 %v97
  %v165 = vpop.f32.mrb[0].mxu0
  %v166 = vadd.f32 %v40, %v165
  %v167 = vpop.f32.mrb[0].mxu0
  %v168 = vpop.f32.mrb[0].mxu0
  %v169 = vadd.f32 %v40, %v168
  %v170 = vpop.f32.mrb[0].mxu0
  %171 = vmatprep.mubr.bf16.mxu0 0
  %172 = vmatmul.mubr.bf16.gmra.mrb[0].mxu0 %v100
  %v173 = vpop.f32.mrb[0].mxu0
  %v174 = vadd.f32 %v40, %v173
  %v175 = vpop.f32.mrb[0].mxu0
  %v176 = vpop.f32.mrb[0].mxu0
  %v177 = vadd.f32 %v40, %v176
  %v178 = vpop.f32.mrb[0].mxu0
  %179 = vmatprep.mubr.bf16.mxu0 0
  %180 = vmatmul.mubr.bf16.gmra.mrb[0].mxu0 %v103
  %v181 = vpop.f32.mrb[0].mxu0
  %v182 = vadd.f32 %v40, %v181
  %v183 = vpop.f32.mrb[0].mxu0
  %v184 = vpop.f32.mrb[0].mxu0
  %v185 = vadd.f32 %v40, %v184
  %v186 = vpop.f32.mrb[0].mxu0
  %187 = vmatprep.mubr.bf16.mxu0 0
  %188 = vmatmul.mubr.bf16.gmra.mrb[0].mxu0 %v106
  %v189 = vpop.f32.mrb[0].mxu0
  %v190 = vadd.f32 %v40, %v189
  %v191 = vpop.f32.mrb[0].mxu0
  %v192 = vpop.f32.mrb[0].mxu0
  %v193 = vadd.f32 %v40, %v192
  %v194 = vpop.f32.mrb[0].mxu0
  %195 = vmatprep.mubr.bf16.mxu0 0
  %196 = vmatmul.mubr.bf16.gmra.mrb[0].mxu0 %v109
  %v197 = vpop.f32.mrb[0].mxu0
  %v198 = vadd.f32 %v40, %v197
  %v199 = vpop.f32.mrb[0].mxu0
  %v200 = vpop.f32.mrb[0].mxu0
  %v201 = vadd.f32 %v40, %v200
  %v202 = vpop.f32.mrb[0].mxu0
  %203 = vmatprep.mubr.bf16.mxu0 0
  %204 = vmatmul.mubr.bf16.gmra.mrb[0].mxu0 %v112
  %v205 = vpop.f32.mrb[0].mxu0
  %v206 = vadd.f32 %v40, %v205
  %v207 = vpop.f32.mrb[0].mxu0
  %v208 = vpop.f32.mrb[0].mxu0
  %v209 = vadd.f32 %v40, %v208
  %v210 = vpop.f32.mrb[0].mxu0
  %211 = vmatprep.mubr.bf16.mxu0 0
  %212 = vmatmul.mubr.bf16.gmra.mrb[0].mxu0 %v115
  %v213 = vpop.f32.mrb[0].mxu0
  %v214 = vadd.f32 %v40, %v213
  %v215 = vpop.f32.mrb[0].mxu0
  %v216 = vpop.f32.mrb[0].mxu0
  %v217 = vadd.f32 %v40, %v216
  %v218 = vpop.f32.mrb[0].mxu0
  %219 = vdwg.mxu0
  %vm220 = vcmask 261120
  %221 = vst.msk [vmem:[%s3] sm:$0xff] %vm220, %v158
  %222 = vst.msk [vmem:[%s3 + $0x8] sm:$0xff] %vm220, %v161
  %223 = vst.msk [vmem:[%s3 + $0x10] sm:$0xff] %vm220, %v166
  %224 = vst.msk [vmem:[%s3 + $0x18] sm:$0xff] %vm220, %v169
  %225 = vst.msk [vmem:[%s3 + $0x20] sm:$0xff] %vm220, %v174
  %226 = vst.msk [vmem:[%s3 + $0x28] sm:$0xff] %vm220, %v177
  %227 = vst.msk [vmem:[%s3 + $0x30] sm:$0xff] %vm220, %v182
  %228 = vst.msk [vmem:[%s3 + $0x38] sm:$0xff] %vm220, %v185
  %229 = vst.msk [vmem:[%s3 + $0x40] sm:$0xff] %vm220, %v190
  %230 = vst.msk [vmem:[%s3 + $0x48] sm:$0xff] %vm220, %v193
  %231 = vst.msk [vmem:[%s3 + $0x50] sm:$0xff] %vm220, %v198
  %232 = vst.msk [vmem:[%s3 + $0x58] sm:$0xff] %vm220, %v201
  %233 = vst.msk [vmem:[%s3 + $0x60] sm:$0xff] %vm220, %v206
  %234 = vst.msk [vmem:[%s3 + $0x68] sm:$0xff] %vm220, %v209
  %235 = vst.msk [vmem:[%s3 + $0x70] sm:$0xff] %vm220, %v214
  %236 = vst.msk [vmem:[%s3 + $0x78] sm:$0xff] %vm220, %v217
  // Predicated region
  $region14: #{_patch_embed_tokens.1} parent=0 // pred_check
    _
  $region15: #{_patch_embed_tokens.1} parent=0 // pred_check_branch
    %238 = sbr.rel (0) target = $region17
  $region16: #{_patch_embed_tokens.1} parent=0 // pred_region
    _
  $region17: #{_patch_embed_tokens.1} parent=0 // pred_fallthru
    _
  // Predicated region
  $region18: #{_patch_embed_tokens.1} parent=0 // pred_check
    _
  $region19: #{_patch_embed_tokens.1} parent=0 // pred_check_branch
    %240 = sbr.rel (0) target = $region21
  $region20: #{_patch_embed_tokens.1} parent=0 // pred_region
    _
  $region21: #{_patch_embed_tokens.1} parent=0 // pred_fallthru
    _

</llo_original>
